<compile_context>
chip_gen: v7x
topology: tpu7x:2x2x1
jax: 0.10.0
libtpu: 0.0.40
codegen_flags: <defaults>
</compile_context>

<pallas_src>
import jax
import jax.numpy as jnp
from jax.experimental import pallas as pl
from jax.experimental.pallas import tpu as pltpu

IN_DIM = 784
HID_DIM = 128
OUT_DIM = 10

K_PAD = 896        # 784 padded up to 7*128 -> lane-dense x loads / fc1 matmul
OUT_PAD = 128      # 10 padded up to 128   -> unmasked, lane-dense output stores
MAX_TILE_B = 512   # batch tile: ~0.9 MB bf16 x-tile (x2 buffers) — far inside the
                   # scoped VMEM budget on v5e (16 MiB), v6e (32 MiB), v7x (32 MiB)


def _round_up(x, m):
    return (x + m - 1) // m * m


def mlp_kernel(x_ref, w1_ref, b1_ref, w2_ref, b2_ref, o_ref):
    # fc1: bf16 MXU matmul, f32 accumulation; bias add + ReLU in f32.
    h = jnp.dot(x_ref[...], w1_ref[...], preferred_element_type=jnp.float32)
    h = jnp.maximum(h + b1_ref[...], 0.0)
    # fc2: cast activations back to bf16 for the MXU, accumulate in f32.
    out = jnp.dot(h.astype(jnp.bfloat16), w2_ref[...],
                  preferred_element_type=jnp.float32)
    o_ref[...] = (out + b2_ref[...]).astype(o_ref.dtype)


def simple_nn_forward(x, w1, b1, w2, b2):
    """x: [B, 784] f32. w1: [784, 128], b1: [1,128], w2: [128, 10], b2: [1,10]
    (weights stored transposed from PyTorch so we compute x @ W + b directly)."""
    B = x.shape[0]
    tile_b = min(MAX_TILE_B, _round_up(B, 8))
    b_pad = _round_up(B, tile_b)

    # Pad + cast wrapper-side: bf16 activations/weights, lane-aligned shapes.
    x_p = jnp.zeros((b_pad, K_PAD), jnp.bfloat16).at[:B, :IN_DIM].set(
        x.astype(jnp.bfloat16))
    w1_p = jnp.zeros((K_PAD, HID_DIM), jnp.bfloat16).at[:IN_DIM, :].set(
        w1.astype(jnp.bfloat16))
    w2_p = jnp.zeros((HID_DIM, OUT_PAD), jnp.bfloat16).at[:, :OUT_DIM].set(
        w2.astype(jnp.bfloat16))
    b1_p = jnp.reshape(b1, (1, HID_DIM)).astype(jnp.float32)
    b2_p = jnp.zeros((1, OUT_PAD), jnp.float32).at[:, :OUT_DIM].set(
        jnp.reshape(b2, (1, OUT_DIM)).astype(jnp.float32))

    cost = pl.CostEstimate(
        flops=2 * b_pad * (K_PAD * HID_DIM + HID_DIM * OUT_PAD),
        transcendentals=0,
        bytes_accessed=(b_pad * K_PAD * 2            # x (bf16)
                        + K_PAD * HID_DIM * 2        # W1 (bf16)
                        + HID_DIM * OUT_PAD * 2      # W2 (bf16)
                        + (HID_DIM + OUT_PAD) * 4    # biases (f32)
                        + b_pad * OUT_PAD * 4),      # output (f32)
    )

    out_padded = pl.pallas_call(
        mlp_kernel,
        out_shape=jax.ShapeDtypeStruct((b_pad, OUT_PAD), jnp.float32),
        grid_spec=pltpu.PrefetchScalarGridSpec(
            num_scalar_prefetch=0,
            grid=(b_pad // tile_b,),
            in_specs=[
                pl.BlockSpec((tile_b, K_PAD), lambda i: (i, 0)),     # x tile (pipelined)
                pl.BlockSpec((K_PAD, HID_DIM), lambda i: (0, 0)),    # W1 (VMEM-resident)
                pl.BlockSpec((1, HID_DIM), lambda i: (0, 0)),        # b1
                pl.BlockSpec((HID_DIM, OUT_PAD), lambda i: (0, 0)),  # W2 (VMEM-resident)
                pl.BlockSpec((1, OUT_PAD), lambda i: (0, 0)),        # b2
            ],
            out_specs=pl.BlockSpec((tile_b, OUT_PAD), lambda i: (i, 0)),
        ),
        compiler_params=pltpu.CompilerParams(
            dimension_semantics=("parallel",)),      # independent batch tiles -> megacore on v7x
        cost_estimate=cost,
    )(x_p, w1_p, b1_p, w2_p, b2_p)

    # Strip batch + lane padding in the wrapper.
    return out_padded[:B, :OUT_DIM]


def init_params(key):
    # PyTorch nn.Linear default init: U(-1/sqrt(fan_in), 1/sqrt(fan_in)).
    k1, k2, k3, k4 = jax.random.split(key, 4)
    bound1 = 1.0 / jnp.sqrt(IN_DIM)
    bound2 = 1.0 / jnp.sqrt(HID_DIM)
    w1 = jax.random.uniform(k1, (IN_DIM, HID_DIM), jnp.float32, -bound1, bound1)
    b1 = jax.random.uniform(k2, (1, HID_DIM), jnp.float32, -bound1, bound1)
    w2 = jax.random.uniform(k3, (HID_DIM, OUT_DIM), jnp.float32, -bound2, bound2)
    b2 = jax.random.uniform(k4, (1, OUT_DIM), jnp.float32, -bound2, bound2)
    return w1, b1, w2, b2


if __name__ == "__main__":
    key = jax.random.PRNGKey(0)
    kx, kp = jax.random.split(key)
    B = 8
    x = jax.random.normal(kx, (B, IN_DIM), jnp.float32)
    w1, b1, w2, b2 = init_params(kp)

    out = simple_nn_forward(x, w1, b1, w2, b2)
    out = jax.block_until_ready(out)
    assert out.shape == (B, OUT_DIM)

    hi = jax.lax.Precision.HIGHEST

    # Tight check: same bf16-rounded inputs / intermediate as the kernel, f32 accumulation.
    x_b = x.astype(jnp.bfloat16).astype(jnp.float32)
    w1_b = w1.astype(jnp.bfloat16).astype(jnp.float32)
    w2_b = w2.astype(jnp.bfloat16).astype(jnp.float32)
    h_ref = jnp.maximum(jnp.dot(x_b, w1_b, precision=hi) + b1, 0.0)
    ref_bf = jnp.dot(h_ref.astype(jnp.bfloat16).astype(jnp.float32), w2_b,
                     precision=hi) + b2
    assert jnp.allclose(out, ref_bf, atol=1e-3, rtol=1e-3)

    # Sanity check vs. the full-precision f32 reference (bf16 rounding tolerance).
    ref_f32 = jnp.dot(jnp.maximum(jnp.dot(x, w1, precision=hi) + b1, 0.0), w2,
                      precision=hi) + b2
    assert jnp.allclose(out, ref_f32, atol=3e-2, rtol=3e-2)

    print("KERNEL_OK")
</pallas_src>

<mosaic_0001>
module attributes {stable_mosaic.version = 11 : i64} {
  func.func @mlp_kernel(%arg0: i32, %arg1: memref<8x896xbf16, #tpu.memory_space<vmem>>, %arg2: memref<896x128xbf16, #tpu.memory_space<vmem>>, %arg3: memref<1x128xf32, #tpu.memory_space<vmem>>, %arg4: memref<128x128xbf16, #tpu.memory_space<vmem>>, %arg5: memref<1x128xf32, #tpu.memory_space<vmem>>, %arg6: memref<8x128xf32, #tpu.memory_space<vmem>>) attributes {dimension_semantics = [#tpu.dimension_semantics<parallel>], iteration_bounds = array<i64: 1>, scalar_prefetch = 0 : i64, scratch_operands = 0 : i64, tpu.core_type = #tpu.core_type<tc>, window_params = [{transform_indices = @transform_0, window_bounds = array<i64: 8, 896>}, {pipeline_mode = #tpu.pipeline_mode<synchronous>, transform_indices = @transform_1, window_bounds = array<i64: 896, 128>}, {pipeline_mode = #tpu.pipeline_mode<synchronous>, transform_indices = @transform_2, window_bounds = array<i64: 1, 128>}, {pipeline_mode = #tpu.pipeline_mode<synchronous>, transform_indices = @transform_3, window_bounds = array<i64: 128, 128>}, {pipeline_mode = #tpu.pipeline_mode<synchronous>, transform_indices = @transform_4, window_bounds = array<i64: 1, 128>}, {transform_indices = @transform_5, window_bounds = array<i64: 8, 128>}]} {
    %c0 = arith.constant 0 : index
    %c0_0 = arith.constant 0 : index
    %0 = vector.load %arg1[%c0, %c0_0] : memref<8x896xbf16, #tpu.memory_space<vmem>>, vector<8x896xbf16>
    %c0_1 = arith.constant 0 : index
    %c0_2 = arith.constant 0 : index
    %1 = vector.load %arg2[%c0_1, %c0_2] : memref<896x128xbf16, #tpu.memory_space<vmem>>, vector<896x128xbf16>
    %cst = arith.constant dense<0.000000e+00> : vector<8x128xf32>
    %2 = tpu.matmul %0, %1, %cst {dimension_numbers = #tpu.dot_dimension_numbers<[1], [0], [0], [1], [0, 0, 1, 1], [], []>} : vector<8x896xbf16>, vector<896x128xbf16>, vector<8x128xf32> -> vector<8x128xf32>
    %c0_3 = arith.constant 0 : index
    %c0_4 = arith.constant 0 : index
    %3 = vector.load %arg3[%c0_3, %c0_4] : memref<1x128xf32, #tpu.memory_space<vmem>>, vector<1x128xf32>
    %4 = vector.broadcast %3 : vector<1x128xf32> to vector<8x128xf32>
    %5 = arith.addf %2, %4 : vector<8x128xf32>
    %cst_5 = arith.constant 0.000000e+00 : f32
    %6 = vector.broadcast %cst_5 : f32 to vector<8x128xf32>
    %7 = arith.maximumf %5, %6 : vector<8x128xf32>
    %8 = arith.truncf %7 : vector<8x128xf32> to vector<8x128xbf16>
    %c0_6 = arith.constant 0 : index
    %c0_7 = arith.constant 0 : index
    %9 = vector.load %arg4[%c0_6, %c0_7] : memref<128x128xbf16, #tpu.memory_space<vmem>>, vector<128x128xbf16>
    %cst_8 = arith.constant dense<0.000000e+00> : vector<8x128xf32>
    %10 = tpu.matmul %8, %9, %cst_8 {dimension_numbers = #tpu.dot_dimension_numbers<[1], [0], [0], [1], [0, 0, 1, 1], [], []>} : vector<8x128xbf16>, vector<128x128xbf16>, vector<8x128xf32> -> vector<8x128xf32>
    %c0_9 = arith.constant 0 : index
    %c0_10 = arith.constant 0 : index
    %11 = vector.load %arg5[%c0_9, %c0_10] : memref<1x128xf32, #tpu.memory_space<vmem>>, vector<1x128xf32>
    %12 = vector.broadcast %11 : vector<1x128xf32> to vector<8x128xf32>
    %13 = arith.addf %10, %12 : vector<8x128xf32>
    %c0_11 = arith.constant 0 : index
    %c0_12 = arith.constant 0 : index
    %14 = vector.load %arg6[%c0_11, %c0_12] : memref<8x128xf32, #tpu.memory_space<vmem>>, vector<8x128xf32>
    tpu.vector_store %arg6[%c0_11, %c0_12], %13 {strides = array<i32>} : memref<8x128xf32, #tpu.memory_space<vmem>>, vector<8x128xf32>,
    return
  }
  func.func @transform_0(%arg0: i32) -> (i32, i32) {
    %c0_i32 = arith.constant 0 : i32
    %c0_i32_0 = arith.constant 0 : i32
    return %arg0, %c0_i32 : i32, i32
  }
  func.func @transform_1(%arg0: i32) -> (i32, i32) {
    %c0_i32 = arith.constant 0 : i32
    %c0_i32_0 = arith.constant 0 : i32
    %c0_i32_1 = arith.constant 0 : i32
    return %c0_i32, %c0_i32_0 : i32, i32
  }
  func.func @transform_2(%arg0: i32) -> (i32, i32) {
    %c0_i32 = arith.constant 0 : i32
    %c0_i32_0 = arith.constant 0 : i32
    %c0_i32_1 = arith.constant 0 : i32
    return %c0_i32, %c0_i32_0 : i32, i32
  }
  func.func @transform_3(%arg0: i32) -> (i32, i32) {
    %c0_i32 = arith.constant 0 : i32
    %c0_i32_0 = arith.constant 0 : i32
    %c0_i32_1 = arith.constant 0 : i32
    return %c0_i32, %c0_i32_0 : i32, i32
  }
  func.func @transform_4(%arg0: i32) -> (i32, i32) {
    %c0_i32 = arith.constant 0 : i32
    %c0_i32_0 = arith.constant 0 : i32
    %c0_i32_1 = arith.constant 0 : i32
    return %c0_i32, %c0_i32_0 : i32, i32
  }
  func.func @transform_5(%arg0: i32) -> (i32, i32) {
    %c0_i32 = arith.constant 0 : i32
    %c0_i32_0 = arith.constant 0 : i32
    return %arg0, %c0_i32 : i32, i32
  }
}

</mosaic_0001>

<llo_original>
// kernel: tpu_custom_call.1
$region0: #{tpu_custom_call.1}
  #allocation0 [shape = 'u32[]', space=smem, size = 0x4, offset = 0x4, fixed_abs, tag = 'smem constant byte address 0x4 - core index']
  #allocation1 [shape = 'u32[144,128]{1,0:T(1,128)}', space=vmem, size = 0x12000, scoped, tag = 'internal scratch']
  %s0 = inlined_call_operand.hbm [shape: bf16[8,896], index: 0, kind: input, shape index: {}]
  %s1 = inlined_call_operand.hbm [shape: bf16[896,128], index: 1, kind: input, shape index: {}]
  %s2 = inlined_call_operand.vmem [shape: f32[1,128], index: 2, kind: input, shape index: {}]
  %s3 = inlined_call_operand.hbm [shape: bf16[128,128], index: 3, kind: input, shape index: {}]
  %s4 = inlined_call_operand.vmem [shape: f32[1,128], index: 4, kind: input, shape index: {}]
  %s5 = inlined_call_operand.hbm [shape: f32[8,128], index: 5, kind: output, shape index: {}]
  %s6 = sld [smem:[#allocation0]]
  $region42: #{tpu_custom_call.1} parent=0
    _
  %s8 = ssub.s32 1, %s6
  %s9 = scalar_select 0, %s8, %s6
  $region1: #{tpu_custom_call.1} parent=0
    #allocation2 [shape = 'u8[14336]{0}', space=vmem, size = 0x3800, scoped, tag = 'input window, operand 0, single buffered']
    #allocation3 [shape = 's32[1]{0}', space=sflag, size = 0x4, scoped, tag = 'scoped memory for tpu_custom_call.1']
    #allocation4 [shape = 's32[1]{0}', space=sflag, size = 0x4, scoped, tag = 'scoped memory for tpu_custom_call.1']
    #allocation5 [shape = 'u8[229376]{0}', space=vmem, size = 0x38000, scoped, tag = 'input window, operand 1, single buffered']
    #allocation6 [shape = 's32[1]{0}', space=sflag, size = 0x4, scoped, tag = 'scoped memory for tpu_custom_call.1']
    #allocation7 [shape = 'u8[32768]{0}', space=vmem, size = 0x8000, scoped, tag = 'input window, operand 3, single buffered']
    #allocation8 [shape = 'u8[4096]{0}', space=vmem, size = 0x1000, scoped, tag = 'output window, operand 0, single buffered']
    %10 = vsyncpa [#allocation3], 0
    %11 = vsyncpa [#allocation6], 0
    %12 = vsyncpa [#allocation4], 0
    // Predicated region
    $region2: #{tpu_custom_call.1} parent=1 // pred_check
      _
    $region3: #{tpu_custom_call.1} parent=1 // pred_check_branch
      %14 = sbr.rel (0) target = $region5
    $region4: #{tpu_custom_call.1} parent=1 // pred_region
      %s16 = ssub.s32 448, 448
      %17 = vsyncadd [#allocation3], %s16
      %s19 = sshll.u32 [#allocation2], 4
      %s20 = int_to_ptr.vmem [resolvable:$true] %s19
      %22 = dma.hbm_to_vmem [thread:$0]  %s0, 448, %s20, [#allocation3]
    $region5: #{tpu_custom_call.1} parent=1 // pred_fallthru
      _
    // Predicated region
    $region6: #{tpu_custom_call.1} parent=1 // pred_check
      _
    $region7: #{tpu_custom_call.1} parent=1 // pred_check_branch
      %24 = sbr.rel (0) target = $region9
    $region8: #{tpu_custom_call.1} parent=1 // pred_region
      %s26 = ssub.s32 7168, 7168
      %27 = vsyncadd [#allocation6], %s26
      %s28 = sshll.u32 [#allocation5], 4
      %s29 = int_to_ptr.vmem [resolvable:$true] %s28
      %34 = dma.hbm_to_vmem [thread:$0]  %s1, 7168, %s29, [#allocation6], 64, 64, 4
    $region9: #{tpu_custom_call.1} parent=1 // pred_fallthru
      _
    // Predicated region
    $region10: #{tpu_custom_call.1} parent=1 // pred_check
      _
    $region11: #{tpu_custom_call.1} parent=1 // pred_check_branch
      %36 = sbr.rel (0) target = $region13
    $region12: #{tpu_custom_call.1} parent=1 // pred_region
      _
    $region13: #{tpu_custom_call.1} parent=1 // pred_fallthru
      _
    // Predicated region
    $region14: #{tpu_custom_call.1} parent=1 // pred_check
      _
    $region15: #{tpu_custom_call.1} parent=1 // pred_check_branch
      %38 = sbr.rel (0) target = $region17
    $region16: #{tpu_custom_call.1} parent=1 // pred_region
      %s40 = ssub.s32 1024, 1024
      %41 = vsyncadd [#allocation6], %s40
      %s42 = sshll.u32 [#allocation7], 4
      %s43 = int_to_ptr.vmem [resolvable:$true] %s42
      %48 = dma.hbm_to_vmem [thread:$0]  %s3, 1024, %s43, [#allocation6], 64, 64, 4
    $region17: #{tpu_custom_call.1} parent=1 // pred_fallthru
      _
    // Predicated region
    $region18: #{tpu_custom_call.1} parent=1 // pred_check
      _
    $region19: #{tpu_custom_call.1} parent=1 // pred_check_branch
      %50 = sbr.rel (0) target = $region21
    $region20: #{tpu_custom_call.1} parent=1 // pred_region
      _
    $region21: #{tpu_custom_call.1} parent=1 // pred_fallthru
      _
    // Predicated region
    $region22: #{tpu_custom_call.1} parent=1 // pred_check
      _
    $region23: #{tpu_custom_call.1} parent=1 // pred_check_branch
      %52 = sbr.rel (0) target = $region25
    $region24: #{tpu_custom_call.1} parent=1 // pred_region
      %53 = dma.done [#allocation3], 448
    $region25: #{tpu_custom_call.1} parent=1 // pred_fallthru
      _
    // Predicated region
    $region26: #{tpu_custom_call.1} parent=1 // pred_check
      _
    $region27: #{tpu_custom_call.1} parent=1 // pred_check_branch
      %55 = sbr.rel (0) target = $region29
    $region28: #{tpu_custom_call.1} parent=1 // pred_region
      %56 = dma.done [#allocation6], 7168
    $region29: #{tpu_custom_call.1} parent=1 // pred_fallthru
      _
    // Predicated region
    $region30: #{tpu_custom_call.1} parent=1 // pred_check
      _
    $region31: #{tpu_custom_call.1} parent=1 // pred_check_branch
      %58 = sbr.rel (0) target = $region33
    $region32: #{tpu_custom_call.1} parent=1 // pred_region
      %59 = dma.done [#allocation6], 1024
    $region33: #{tpu_custom_call.1} parent=1 // pred_fallthru
      _
    %v61 = vld [vmem:[#allocation2] sm:$0xff]
    %v62 = vld [vmem:[#allocation2 + $0x8] sm:$0xff]
    %v63 = vld [vmem:[#allocation2 + $0x10] sm:$0xff]
    %v64 = vld [vmem:[#allocation2 + $0x18] sm:$0xf]
    %v65 = vld [vmem:[#allocation5] sm:$0xf]
    %v66 = vld [vmem:[#allocation5 + $0x4] sm:$0xf]
    %v67 = vld [vmem:[#allocation5 + $0x8] sm:$0xf]
    %v68 = vld [vmem:[#allocation5 + $0xc] sm:$0xf]
    %v69 = vld [vmem:[#allocation5 + $0x10] sm:$0xf]
    %v70 = vld [vmem:[#allocation5 + $0x14] sm:$0xf]
    %v71 = vld [vmem:[#allocation5 + $0x18] sm:$0xf]
    %v72 = vld [vmem:[#allocation5 + $0x1c] sm:$0xf]
    %v73 = vld [vmem:[#allocation5 + $0x20] sm:$0xf]
    %v74 = vld [vmem:[#allocation5 + $0x24] sm:$0xf]
    %v75 = vld [vmem:[#allocation5 + $0x28] sm:$0xf]
    %v76 = vld [vmem:[#allocation5 + $0x2c] sm:$0xf]
    %v77 = vld [vmem:[#allocation5 + $0x30] sm:$0xf]
    %v78 = vld [vmem:[#allocation5 + $0x34] sm:$0xf]
    %v79 = vld [vmem:[#allocation5 + $0x38] sm:$0xf]
    %v80 = vld [vmem:[#allocation5 + $0x3c] sm:$0xf]
    %v81 = vld [vmem:[#allocation5 + $0x40] sm:$0xf]
    %v82 = vld [vmem:[#allocation5 + $0x44] sm:$0xf]
    %v83 = vld [vmem:[#allocation5 + $0x48] sm:$0xf]
    %v84 = vld [vmem:[#allocation5 + $0x4c] sm:$0xf]
    %v85 = vld [vmem:[#allocation5 + $0x50] sm:$0xf]
    %v86 = vld [vmem:[#allocation5 + $0x54] sm:$0xf]
    %v87 = vld [vmem:[#allocation5 + $0x58] sm:$0xf]
    %v88 = vld [vmem:[#allocation5 + $0x5c] sm:$0xf]
    %v89 = vld [vmem:[#allocation5 + $0x60] sm:$0xf]
    %v90 = vld [vmem:[#allocation5 + $0x64] sm:$0xf]
    %v91 = vld [vmem:[#allocation5 + $0x68] sm:$0xf]
    %v92 = vld [vmem:[#allocation5 + $0x6c] sm:$0xf]
    %v93 = vld [vmem:[#allocation5 + $0x70] sm:$0xf]
    %v94 = vld [vmem:[#allocation5 + $0x74] sm:$0xf]
    %v95 = vld [vmem:[#allocation5 + $0x78] sm:$0xf]
    %v96 = vld [vmem:[#allocation5 + $0x7c] sm:$0xf]
    %v97 = vld [vmem:[#allocation5 + $0x80] sm:$0xf]
    %v98 = vld [vmem:[#allocation5 + $0x84] sm:$0xf]
    %v99 = vld [vmem:[#allocation5 + $0x88] sm:$0xf]
    %v100 = vld [vmem:[#allocation5 + $0x8c] sm:$0xf]
    %v101 = vld [vmem:[#allocation5 + $0x90] sm:$0xf]
    %v102 = vld [vmem:[#allocation5 + $0x94] sm:$0xf]
    %v103 = vld [vmem:[#allocation5 + $0x98] sm:$0xf]
    %v104 = vld [vmem:[#allocation5 + $0x9c] sm:$0xf]
    %v105 = vld [vmem:[#allocation5 + $0xa0] sm:$0xf]
    %v106 = vld [vmem:[#allocation5 + $0xa4] sm:$0xf]
    %v107 = vld [vmem:[#allocation5 + $0xa8] sm:$0xf]
    %v108 = vld [vmem:[#allocation5 + $0xac] sm:$0xf]
    %v109 = vld [vmem:[#allocation5 + $0xb0] sm:$0xf]
    %v110 = vld [vmem:[#allocation5 + $0xb4] sm:$0xf]
    %v111 = vld [vmem:[#allocation5 + $0xb8] sm:$0xf]
    %v112 = vld [vmem:[#allocation5 + $0xbc] sm:$0xf]
    %v113 = vld [vmem:[#allocation5 + $0xc0] sm:$0xf]
    %v114 = vld [vmem:[#allocation5 + $0xc4] sm:$0xf]
    %v115 = vld [vmem:[#allocation5 + $0xc8] sm:$0xf]
    %v116 = vld [vmem:[#allocation5 + $0xcc] sm:$0xf]
    %v117 = vld [vmem:[#allocation5 + $0xd0] sm:$0xf]
    %v118 = vld [vmem:[#allocation5 + $0xd4] sm:$0xf]
    %v119 = vld [vmem:[#allocation5 + $0xd8] sm:$0xf]
    %v120 = vld [vmem:[#allocation5 + $0xdc] sm:$0xf]
    %v121 = vld [vmem:[#allocation5 + $0xe0] sm:$0xf]
    %v122 = vld [vmem:[#allocation5 + $0xe4] sm:$0xf]
    %v123 = vld [vmem:[#allocation5 + $0xe8] sm:$0xf]
    %v124 = vld [vmem:[#allocation5 + $0xec] sm:$0xf]
    %v125 = vld [vmem:[#allocation5 + $0xf0] sm:$0xf]
    %v126 = vld [vmem:[#allocation5 + $0xf4] sm:$0xf]
    %v127 = vld [vmem:[#allocation5 + $0xf8] sm:$0xf]
    %v128 = vld [vmem:[#allocation5 + $0xfc] sm:$0xf]
    %v129 = vld [vmem:[#allocation5 + $0x100] sm:$0xf]
    %v130 = vld [vmem:[#allocation5 + $0x104] sm:$0xf]
    %v131 = vld [vmem:[#allocation5 + $0x108] sm:$0xf]
    %v132 = vld [vmem:[#allocation5 + $0x10c] sm:$0xf]
    %v133 = vld [vmem:[#allocation5 + $0x110] sm:$0xf]
    %v134 = vld [vmem:[#allocation5 + $0x114] sm:$0xf]
    %v135 = vld [vmem:[#allocation5 + $0x118] sm:$0xf]
    %v136 = vld [vmem:[#allocation5 + $0x11c] sm:$0xf]
    %v137 = vld [vmem:[#allocation5 + $0x120] sm:$0xf]
    %v138 = vld [vmem:[#allocation5 + $0x124] sm:$0xf]
    %v139 = vld [vmem:[#allocation5 + $0x128] sm:$0xf]
    %v140 = vld [vmem:[#allocation5 + $0x12c] sm:$0xf]
    %v141 = vld [vmem:[#allocation5 + $0x130] sm:$0xf]
    %v142 = vld [vmem:[#allocation5 + $0x134] sm:$0xf]
    %v143 = vld [vmem:[#allocation5 + $0x138] sm:$0xf]
    %v144 = vld [vmem:[#allocation5 + $0x13c] sm:$0xf]
    %v145 = vld [vmem:[#allocation5 + $0x140] sm:$0xf]
    %v146 = vld [vmem:[#allocation5 + $0x144] sm:$0xf]
    %v147 = vld [vmem:[#allocation5 + $0x148] sm:$0xf]
    %v148 = vld [vmem:[#allocation5 + $0x14c] sm:$0xf]
    %v149 = vld [vmem:[#allocation5 + $0x150] sm:$0xf]
    %v150 = vld [vmem:[#allocation5 + $0x154] sm:$0xf]
    %v151 = vld [vmem:[#allocation5 + $0x158] sm:$0xf]
    %v152 = vld [vmem:[#allocation5 + $0x15c] sm:$0xf]
    %v153 = vld [vmem:[#allocation5 + $0x160] sm:$0xf]
    %v154 = vld [vmem:[#allocation5 + $0x164] sm:$0xf]
    %v155 = vld [vmem:[#allocation5 + $0x168] sm:$0xf]
    %v156 = vld [vmem:[#allocation5 + $0x16c] sm:$0xf]
    %v157 = vld [vmem:[#allocation5 + $0x170] sm:$0xf]
    %v158 = vld [vmem:[#allocation5 + $0x174] sm:$0xf]
    %v159 = vld [vmem:[#allocation5 + $0x178] sm:$0xf]
    %v160 = vld [vmem:[#allocation5 + $0x17c] sm:$0xf]
    %v161 = vld [vmem:[#allocation5 + $0x180] sm:$0xf]
    %v162 = vld [vmem:[#allocation5 + $0x184] sm:$0xf]
    %v163 = vld [vmem:[#allocation5 + $0x188] sm:$0xf]
    %v164 = vld [vmem:[#allocation5 + $0x18c] sm:$0xf]
    %v165 = vld [vmem:[#allocation5 + $0x190] sm:$0xf]
    %v166 = vld [vmem:[#allocation5 + $0x194] sm:$0xf]
    %v167 = vld [vmem:[#allocation5 + $0x198] sm:$0xf]
    %v168 = vld [vmem:[#allocation5 + $0x19c] sm:$0xf]
    %v169 = vld [vmem:[#allocation5 + $0x1a0] sm:$0xf]
    %v170 = vld [vmem:[#allocation5 + $0x1a4] sm:$0xf]
    %v171 = vld [vmem:[#allocation5 + $0x1a8] sm:$0xf]
    %v172 = vld [vmem:[#allocation5 + $0x1ac] sm:$0xf]
    %v173 = vld [vmem:[#allocation5 + $0x1b0] sm:$0xf]
    %v174 = vld [vmem:[#allocation5 + $0x1b4] sm:$0xf]
    %v175 = vld [vmem:[#allocation5 + $0x1b8] sm:$0xf]
    %v176 = vld [vmem:[#allocation5 + $0x1bc] sm:$0xf]
    %v177 = vld [vmem:[%s2] sm:$0x1]
    %v179 = vlaneseq
    %v180 = vshrl.u32 %v179, 7
    %v181 = vsub.s32 0, %v180
    %v182 = vrot.slane %v177, %v181
    %v188 = vunpack.c.l.b16 %v61
    %v189 = vunpack.c.h.b16 %v61
    %v190 = vunpack.c.l.b16 %v62
    %v191 = vunpack.c.h.b16 %v62
    %v192 = vunpack.c.l.b16 %v63
    %v193 = vunpack.c.h.b16 %v63
    %v194 = vunpack.c.l.b16 %v64
    %v195 = vpack.c.b16 %v188, %v188
    %v196 = vpack.c.b16 %v189, %v189
    %v197 = vpack.c.b16 %v190, %v190
    %v198 = vpack.c.b16 %v191, %v191
    %v199 = vpack.c.b16 %v192, %v192
    %v200 = vpack.c.b16 %v193, %v193
    %v201 = vpack.c.b16 %v194, %v194
    %v321 = vunpack.c.l.b16 %v65
    %v322 = vunpack.c.l.b16 %v66
    %v323 = vunpack.c.l.b16 %v67
    %v324 = vunpack.c.l.b16 %v68
    %v325 = vunpack.c.l.b16 %v69
    %v326 = vunpack.c.l.b16 %v70
    %v327 = vunpack.c.l.b16 %v71
    %v328 = vunpack.c.l.b16 %v72
    %v329 = vunpack.c.l.b16 %v73
    %v330 = vunpack.c.l.b16 %v74
    %v331 = vunpack.c.l.b16 %v75
    %v332 = vunpack.c.l.b16 %v76
    %v333 = vunpack.c.l.b16 %v77
    %v334 = vunpack.c.l.b16 %v78
    %v335 = vunpack.c.l.b16 %v79
    %v336 = vunpack.c.l.b16 %v80
    %v337 = vunpack.c.l.b16 %v81
    %v338 = vunpack.c.l.b16 %v82
    %v339 = vunpack.c.l.b16 %v83
    %v340 = vunpack.c.l.b16 %v84
    %v341 = vunpack.c.l.b16 %v85
    %v342 = vunpack.c.l.b16 %v86
    %v343 = vunpack.c.l.b16 %v87
    %v344 = vunpack.c.l.b16 %v88
    %v345 = vunpack.c.l.b16 %v89
    %v346 = vunpack.c.l.b16 %v90
    %v347 = vunpack.c.l.b16 %v91
    %v348 = vunpack.c.l.b16 %v92
    %v349 = vunpack.c.l.b16 %v93
    %v350 = vunpack.c.l.b16 %v94
    %v351 = vunpack.c.l.b16 %v95
    %v352 = vunpack.c.l.b16 %v96
    %v353 = vunpack.c.l.b16 %v97
    %v354 = vunpack.c.l.b16 %v98
    %v355 = vunpack.c.l.b16 %v99
    %v356 = vunpack.c.l.b16 %v100
    %v357 = vunpack.c.l.b16 %v101
    %v358 = vunpack.c.l.b16 %v102
    %v359 = vunpack.c.l.b16 %v103
    %v360 = vunpack.c.l.b16 %v104
    %v361 = vunpack.c.l.b16 %v105
    %v362 = vunpack.c.l.b16 %v106
    %v363 = vunpack.c.l.b16 %v107
    %v364 = vunpack.c.l.b16 %v108
    %v365 = vunpack.c.l.b16 %v109
    %v366 = vunpack.c.l.b16 %v110
    %v367 = vunpack.c.l.b16 %v111
    %v368 = vunpack.c.l.b16 %v112
    %v369 = vunpack.c.l.b16 %v113
    %v370 = vunpack.c.l.b16 %v114
    %v371 = vunpack.c.l.b16 %v115
    %v372 = vunpack.c.l.b16 %v116
    %v373 = vunpack.c.l.b16 %v117
    %v374 = vunpack.c.l.b16 %v118
    %v375 = vunpack.c.l.b16 %v119
    %v376 = vunpack.c.l.b16 %v120
    %v377 = vunpack.c.l.b16 %v121
    %v378 = vunpack.c.l.b16 %v122
    %v379 = vunpack.c.l.b16 %v123
    %v380 = vunpack.c.l.b16 %v124
    %v381 = vunpack.c.l.b16 %v125
    %v382 = vunpack.c.l.b16 %v126
    %v383 = vunpack.c.l.b16 %v127
    %v384 = vunpack.c.l.b16 %v128
    %v385 = vunpack.c.l.b16 %v129
    %v386 = vunpack.c.l.b16 %v130
    %v387 = vunpack.c.l.b16 %v131
    %v388 = vunpack.c.l.b16 %v132
    %v389 = vunpack.c.l.b16 %v133
    %v390 = vunpack.c.l.b16 %v134
    %v391 = vunpack.c.l.b16 %v135
    %v392 = vunpack.c.l.b16 %v136
    %v393 = vunpack.c.l.b16 %v137
    %v394 = vunpack.c.l.b16 %v138
    %v395 = vunpack.c.l.b16 %v139
    %v396 = vunpack.c.l.b16 %v140
    %v397 = vunpack.c.l.b16 %v141
    %v398 = vunpack.c.l.b16 %v142
    %v399 = vunpack.c.l.b16 %v143
    %v400 = vunpack.c.l.b16 %v144
    %v401 = vunpack.c.l.b16 %v145
    %v402 = vunpack.c.l.b16 %v146
    %v403 = vunpack.c.l.b16 %v147
    %v404 = vunpack.c.l.b16 %v148
    %v405 = vunpack.c.l.b16 %v149
    %v406 = vunpack.c.l.b16 %v150
    %v407 = vunpack.c.l.b16 %v151
    %v408 = vunpack.c.l.b16 %v152
    %v409 = vunpack.c.l.b16 %v153
    %v410 = vunpack.c.l.b16 %v154
    %v411 = vunpack.c.l.b16 %v155
    %v412 = vunpack.c.l.b16 %v156
    %v413 = vunpack.c.l.b16 %v157
    %v414 = vunpack.c.l.b16 %v158
    %v415 = vunpack.c.l.b16 %v159
    %v416 = vunpack.c.l.b16 %v160
    %v417 = vunpack.c.l.b16 %v161
    %v418 = vunpack.c.l.b16 %v162
    %v419 = vunpack.c.l.b16 %v163
    %v420 = vunpack.c.l.b16 %v164
    %v421 = vunpack.c.l.b16 %v165
    %v422 = vunpack.c.l.b16 %v166
    %v423 = vunpack.c.l.b16 %v167
    %v424 = vunpack.c.l.b16 %v168
    %v425 = vunpack.c.l.b16 %v169
    %v426 = vunpack.c.l.b16 %v170
    %v427 = vunpack.c.l.b16 %v171
    %v428 = vunpack.c.l.b16 %v172
    %v429 = vunpack.c.l.b16 %v173
    %v430 = vunpack.c.l.b16 %v174
    %v431 = vunpack.c.l.b16 %v175
    %v432 = vunpack.c.l.b16 %v176
    %v433 = vpack.c.b16 %v322, %v321
    %v434 = vpack.c.b16 %v324, %v323
    %v435 = vpack.c.b16 %v326, %v325
    %v436 = vpack.c.b16 %v328, %v327
    %v437 = vpack.c.b16 %v330, %v329
    %v438 = vpack.c.b16 %v332, %v331
    %v439 = vpack.c.b16 %v334, %v333
    %v440 = vpack.c.b16 %v336, %v335
    %v441 = vpack.c.b16 %v338, %v337
    %v442 = vpack.c.b16 %v340, %v339
    %v443 = vpack.c.b16 %v342, %v341
    %v444 = vpack.c.b16 %v344, %v343
    %v445 = vpack.c.b16 %v346, %v345
    %v446 = vpack.c.b16 %v348, %v347
    %v447 = vpack.c.b16 %v350, %v349
    %v448 = vpack.c.b16 %v352, %v351
    %v449 = vpack.c.b16 %v354, %v353
    %v450 = vpack.c.b16 %v356, %v355
    %v451 = vpack.c.b16 %v358, %v357
    %v452 = vpack.c.b16 %v360, %v359
    %v453 = vpack.c.b16 %v362, %v361
    %v454 = vpack.c.b16 %v364, %v363
    %v455 = vpack.c.b16 %v366, %v365
    %v456 = vpack.c.b16 %v368, %v367
    %v457 = vpack.c.b16 %v370, %v369
    %v458 = vpack.c.b16 %v372, %v371
    %v459 = vpack.c.b16 %v374, %v373
    %v460 = vpack.c.b16 %v376, %v375
    %v461 = vpack.c.b16 %v378, %v377
    %v462 = vpack.c.b16 %v380, %v379
    %v463 = vpack.c.b16 %v382, %v381
    %v464 = vpack.c.b16 %v384, %v383
    %v465 = vpack.c.b16 %v386, %v385
    %v466 = vpack.c.b16 %v388, %v387
    %v467 = vpack.c.b16 %v390, %v389
    %v468 = vpack.c.b16 %v392, %v391
    %v469 = vpack.c.b16 %v394, %v393
    %v470 = vpack.c.b16 %v396, %v395
    %v471 = vpack.c.b16 %v398, %v397
    %v472 = vpack.c.b16 %v400, %v399
    %v473 = vpack.c.b16 %v402, %v401
    %v474 = vpack.c.b16 %v404, %v403
    %v475 = vpack.c.b16 %v406, %v405
    %v476 = vpack.c.b16 %v408, %v407
    %v477 = vpack.c.b16 %v410, %v409
    %v478 = vpack.c.b16 %v412, %v411
    %v479 = vpack.c.b16 %v414, %v413
    %v480 = vpack.c.b16 %v416, %v415
    %v481 = vpack.c.b16 %v418, %v417
    %v482 = vpack.c.b16 %v420, %v419
    %v483 = vpack.c.b16 %v422, %v421
    %v484 = vpack.c.b16 %v424, %v423
    %v485 = vpack.c.b16 %v426, %v425
    %v486 = vpack.c.b16 %v428, %v427
    %v487 = vpack.c.b16 %v430, %v429
    %v488 = vpack.c.b16 %v432, %v431
    %545 = vmatprep.subr.bf16.mxu0 0
    %546 = vmatpush1.bf16.msra.mxu0 %v433
    %547 = vmatprep.subr.bf16.mxu0 0
    %548 = vmatpush1.bf16.msra.mxu0 %v434
    %549 = vmatprep.subr.bf16.mxu0 0
    %550 = vmatpush1.bf16.msra.mxu0 %v435
    %551 = vmatprep.subr.bf16.mxu0 0
    %552 = vmatpush1.bf16.msra.mxu0 %v436
    %553 = vmatprep.subr.bf16.mxu0 0
    %554 = vmatpush1.bf16.msra.mxu0 %v437
    %555 = vmatprep.subr.bf16.mxu0 0
    %556 = vmatpush1.bf16.msra.mxu0 %v438
    %557 = vmatprep.subr.bf16.mxu0 0
    %558 = vmatpush1.bf16.msra.mxu0 %v439
    %559 = vmatprep.subr.bf16.mxu0 0
    %560 = vmatpush1.bf16.msra.mxu0 %v440
    %561 = vmatprep.subr.bf16.mxu0 0
    %562 = vmatpush1.bf16.msra.mxu0 %v441
    %563 = vmatprep.subr.bf16.mxu0 0
    %564 = vmatpush1.bf16.msra.mxu0 %v442
    %565 = vmatprep.subr.bf16.mxu0 0
    %566 = vmatpush1.bf16.msra.mxu0 %v443
    %567 = vmatprep.subr.bf16.mxu0 0
    %568 = vmatpush1.bf16.msra.mxu0 %v444
    %569 = vmatprep.subr.bf16.mxu0 0
    %570 = vmatpush1.bf16.msra.mxu0 %v445
    %571 = vmatprep.subr.bf16.mxu0 0
    %572 = vmatpush1.bf16.msra.mxu0 %v446
    %573 = vmatprep.subr.bf16.mxu0 0
    %574 = vmatpush1.bf16.msra.mxu0 %v447
    %575 = vmatprep.subr.bf16.mxu0 0
    %576 = vmatpush1.bf16.msra.mxu0 %v448
    %577 = vmatprep.mubr.bf16.mxu0 %v196
    %578 = vmatmul.mubr.bf16.gmra.mrb[0].mxu0 %v195
    %v579 = vpop.f32.mrb[0].mxu0
    %v580 = vadd.f32 %v182, %v579
    %v581 = vpop.f32.mrb[0].mxu0
    %v582 = vpop.f32.mrb[0].mxu0
    %v583 = vpop.f32.mrb[0].mxu0
    %584 = vdwg.mxu0
    %585 = vmatprep.subr.bf16.mxu0 0
    %586 = vmatpush1.bf16.msra.mxu0 %v449
    %587 = vmatprep.subr.bf16.mxu0 0
    %588 = vmatpush1.bf16.msra.mxu0 %v450
    %589 = vmatprep.subr.bf16.mxu0 0
    %590 = vmatpush1.bf16.msra.mxu0 %v451
    %591 = vmatprep.subr.bf16.mxu0 0
    %592 = vmatpush1.bf16.msra.mxu0 %v452
    %593 = vmatprep.subr.bf16.mxu0 0
    %594 = vmatpush1.bf16.msra.mxu0 %v453
    %595 = vmatprep.subr.bf16.mxu0 0
    %596 = vmatpush1.bf16.msra.mxu0 %v454
    %597 = vmatprep.subr.bf16.mxu0 0
    %598 = vmatpush1.bf16.msra.mxu0 %v455
    %599 = vmatprep.subr.bf16.mxu0 0
    %600 = vmatpush1.bf16.msra.mxu0 %v456
    %601 = vmatprep.subr.bf16.mxu0 0
    %602 = vmatpush1.bf16.msra.mxu0 %v457
    %603 = vmatprep.subr.bf16.mxu0 0
    %604 = vmatpush1.bf16.msra.mxu0 %v458
    %605 = vmatprep.subr.bf16.mxu0 0
    %606 = vmatpush1.bf16.msra.mxu0 %v459
    %607 = vmatprep.subr.bf16.mxu0 0
    %608 = vmatpush1.bf16.msra.mxu0 %v460
    %609 = vmatprep.subr.bf16.mxu0 0
    %610 = vmatpush1.bf16.msra.mxu0 %v461
    %611 = vmatprep.subr.bf16.mxu0 0
    %612 = vmatpush1.bf16.msra.mxu0 %v462
    %613 = vmatprep.subr.bf16.mxu0 0
    %614 = vmatpush1.bf16.msra.mxu0 %v463
    %615 = vmatprep.subr.bf16.mxu0 0
    %616 = vmatpush1.bf16.msra.mxu0 %v464
    %617 = vmatprep.mubr.bf16.mxu0 %v198
    %618 = vmatmul.mubr.bf16.gmra.mrb[0].mxu0 %v197
    %v619 = vpop.f32.mrb[0].mxu0
    %v620 = vadd.f32 %v580, %v619
    %v621 = vpop.f32.mrb[0].mxu0
    %v622 = vpop.f32.mrb[0].mxu0
    %v623 = vpop.f32.mrb[0].mxu0
    %624 = vdwg.mxu0
    %625 = vmatprep.subr.bf16.mxu0 0
    %626 = vmatpush1.bf16.msra.mxu0 %v465
    %627 = vmatprep.subr.bf16.mxu0 0
    %628 = vmatpush1.bf16.msra.mxu0 %v466
    %629 = vmatprep.subr.bf16.mxu0 0
    %630 = vmatpush1.bf16.msra.mxu0 %v467
    %631 = vmatprep.subr.bf16.mxu0 0
    %632 = vmatpush1.bf16.msra.mxu0 %v468
    %633 = vmatprep.subr.bf16.mxu0 0
    %634 = vmatpush1.bf16.msra.mxu0 %v469
    %635 = vmatprep.subr.bf16.mxu0 0
    %636 = vmatpush1.bf16.msra.mxu0 %v470
    %637 = vmatprep.subr.bf16.mxu0 0
    %638 = vmatpush1.bf16.msra.mxu0 %v471
    %639 = vmatprep.subr.bf16.mxu0 0
    %640 = vmatpush1.bf16.msra.mxu0 %v472
    %641 = vmatprep.subr.bf16.mxu0 0
    %642 = vmatpush1.bf16.msra.mxu0 %v473
    %643 = vmatprep.subr.bf16.mxu0 0
    %644 = vmatpush1.bf16.msra.mxu0 %v474
    %645 = vmatprep.subr.bf16.mxu0 0
    %646 = vmatpush1.bf16.msra.mxu0 %v475
    %647 = vmatprep.subr.bf16.mxu0 0
    %648 = vmatpush1.bf16.msra.mxu0 %v476
    %649 = vmatprep.subr.bf16.mxu0 0
    %650 = vmatpush1.bf16.msra.mxu0 %v477
    %651 = vmatprep.subr.bf16.mxu0 0
    %652 = vmatpush1.bf16.msra.mxu0 %v478
    %653 = vmatprep.subr.bf16.mxu0 0
    %654 = vmatpush1.bf16.msra.mxu0 %v479
    %655 = vmatprep.subr.bf16.mxu0 0
    %656 = vmatpush1.bf16.msra.mxu0 %v480
    %657 = vmatprep.mubr.bf16.mxu0 %v200
    %658 = vmatmul.mubr.bf16.gmra.mrb[0].mxu0 %v199
    %v659 = vpop.f32.mrb[0].mxu0
    %v660 = vadd.f32 %v620, %v659
    %v661 = vpop.f32.mrb[0].mxu0
    %v662 = vpop.f32.mrb[0].mxu0
    %v663 = vpop.f32.mrb[0].mxu0
    %664 = vdwg.mxu0
    %665 = vmatprep.subr.bf16.mxu0 0
    %666 = vmatpush1.bf16.msra.mxu0 %v481
    %667 = vmatprep.subr.bf16.mxu0 0
    %668 = vmatpush1.bf16.msra.mxu0 %v482
    %669 = vmatprep.subr.bf16.mxu0 0
    %670 = vmatpush1.bf16.msra.mxu0 %v483
    %671 = vmatprep.subr.bf16.mxu0 0
    %672 = vmatpush1.bf16.msra.mxu0 %v484
    %673 = vmatprep.subr.bf16.mxu0 0
    %674 = vmatpush1.bf16.msra.mxu0 %v485
    %675 = vmatprep.subr.bf16.mxu0 0
    %676 = vmatpush1.bf16.msra.mxu0 %v486
    %677 = vmatprep.subr.bf16.mxu0 0
    %678 = vmatpush1.bf16.msra.mxu0 %v487
    %679 = vmatprep.subr.bf16.mxu0 0
    %680 = vmatpush1.bf16.msra.mxu0 %v488
    %681 = vmatprep.subr.bf16.mxu0 0
    %682 = vmatpush1.bf16.msra.mxu0 0
    %683 = vmatprep.subr.bf16.mxu0 0
    %684 = vmatpush1.bf16.msra.mxu0 0
    %685 = vmatprep.subr.bf16.mxu0 0
    %686 = vmatpush1.bf16.msra.mxu0 0
    %687 = vmatprep.subr.bf16.mxu0 0
    %688 = vmatpush1.bf16.msra.mxu0 0
    %689 = vmatprep.subr.bf16.mxu0 0
    %690 = vmatpush1.bf16.msra.mxu0 0
    %691 = vmatprep.subr.bf16.mxu0 0
    %692 = vmatpush1.bf16.msra.mxu0 0
    %693 = vmatprep.subr.bf16.mxu0 0
    %694 = vmatpush1.bf16.msra.mxu0 0
    %695 = vmatprep.subr.bf16.mxu0 0
    %696 = vmatpush1.bf16.msra.mxu0 0
    %697 = vmatprep.mubr.bf16.mxu0 0
    %698 = vmatmul.mubr.bf16.gmra.mrb[0].mxu0 %v201
    %v699 = vpop.f32.mrb[0].mxu0
    %v700 = vadd.f32 %v660, %v699
    %v701 = vpop.f32.mrb[0].mxu0
    %v702 = vpop.f32.mrb[0].mxu0
    %v703 = vpop.f32.mrb[0].mxu0
    %704 = vdwg.mxu0
    %v705 = vmax.f32 %v700, 0.0
    %v706 = vpack.c.bf16 %v705, %v705
    %v707 = vld [vmem:[#allocation7] sm:$0xf]
    %v708 = vld [vmem:[#allocation7 + $0x4] sm:$0xf]
    %v709 = vld [vmem:[#allocation7 + $0x8] sm:$0xf]
    %v710 = vld [vmem:[#allocation7 + $0xc] sm:$0xf]
    %v711 = vld [vmem:[#allocation7 + $0x10] sm:$0xf]
    %v712 = vld [vmem:[#allocation7 + $0x14] sm:$0xf]
    %v713 = vld [vmem:[#allocation7 + $0x18] sm:$0xf]
    %v714 = vld [vmem:[#allocation7 + $0x1c] sm:$0xf]
    %v715 = vld [vmem:[#allocation7 + $0x20] sm:$0xf]
    %v716 = vld [vmem:[#allocation7 + $0x24] sm:$0xf]
    %v717 = vld [vmem:[#allocation7 + $0x28] sm:$0xf]
    %v718 = vld [vmem:[#allocation7 + $0x2c] sm:$0xf]
    %v719 = vld [vmem:[#allocation7 + $0x30] sm:$0xf]
    %v720 = vld [vmem:[#allocation7 + $0x34] sm:$0xf]
    %v721 = vld [vmem:[#allocation7 + $0x38] sm:$0xf]
    %v722 = vld [vmem:[#allocation7 + $0x3c] sm:$0xf]
    %v723 = vld [vmem:[%s4] sm:$0x1]
    %v725 = vlaneseq
    %v726 = vshrl.u32 %v725, 7
    %v727 = vsub.s32 0, %v726
    %v728 = vrot.slane %v723, %v727
    %v746 = vunpack.c.l.b16 %v707
    %v747 = vunpack.c.l.b16 %v708
    %v748 = vunpack.c.l.b16 %v709
    %v749 = vunpack.c.l.b16 %v710
    %v750 = vunpack.c.l.b16 %v711
    %v751 = vunpack.c.l.b16 %v712
    %v752 = vunpack.c.l.b16 %v713
    %v753 = vunpack.c.l.b16 %v714
    %v754 = vunpack.c.l.b16 %v715
    %v755 = vunpack.c.l.b16 %v716
    %v756 = vunpack.c.l.b16 %v717
    %v757 = vunpack.c.l.b16 %v718
    %v758 = vunpack.c.l.b16 %v719
    %v759 = vunpack.c.l.b16 %v720
    %v760 = vunpack.c.l.b16 %v721
    %v761 = vunpack.c.l.b16 %v722
    %v762 = vpack.c.b16 %v747, %v746
    %v763 = vpack.c.b16 %v749, %v748
    %v764 = vpack.c.b16 %v751, %v750
    %v765 = vpack.c.b16 %v753, %v752
    %v766 = vpack.c.b16 %v755, %v754
    %v767 = vpack.c.b16 %v757, %v756
    %v768 = vpack.c.b16 %v759, %v758
    %v769 = vpack.c.b16 %v761, %v760
    %778 = vmatprep.subr.bf16.mxu0 0
    %779 = vmatpush1.bf16.msra.mxu0 %v762
    %780 = vmatprep.subr.bf16.mxu0 0
    %781 = vmatpush1.bf16.msra.mxu0 %v763
    %782 = vmatprep.subr.bf16.mxu0 0
    %783 = vmatpush1.bf16.msra.mxu0 %v764
    %784 = vmatprep.subr.bf16.mxu0 0
    %785 = vmatpush1.bf16.msra.mxu0 %v765
    %786 = vmatprep.subr.bf16.mxu0 0
    %787 = vmatpush1.bf16.msra.mxu0 %v766
    %788 = vmatprep.subr.bf16.mxu0 0
    %789 = vmatpush1.bf16.msra.mxu0 %v767
    %790 = vmatprep.subr.bf16.mxu0 0
    %791 = vmatpush1.bf16.msra.mxu0 %v768
    %792 = vmatprep.subr.bf16.mxu0 0
    %793 = vmatpush1.bf16.msra.mxu0 %v769
    %794 = vmatprep.subr.bf16.mxu0 0
    %795 = vmatpush1.bf16.msra.mxu0 0
    %796 = vmatprep.subr.bf16.mxu0 0
    %797 = vmatpush1.bf16.msra.mxu0 0
    %798 = vmatprep.subr.bf16.mxu0 0
    %799 = vmatpush1.bf16.msra.mxu0 0
    %800 = vmatprep.subr.bf16.mxu0 0
    %801 = vmatpush1.bf16.msra.mxu0 0
    %802 = vmatprep.subr.bf16.mxu0 0
    %803 = vmatpush1.bf16.msra.mxu0 0
    %804 = vmatprep.subr.bf16.mxu0 0
    %805 = vmatpush1.bf16.msra.mxu0 0
    %806 = vmatprep.subr.bf16.mxu0 0
    %807 = vmatpush1.bf16.msra.mxu0 0
    %808 = vmatprep.subr.bf16.mxu0 0
    %809 = vmatpush1.bf16.msra.mxu0 0
    %810 = vmatprep.mubr.bf16.mxu0 0
    %811 = vmatmul.mubr.bf16.gmra.mrb[0].mxu0 %v706
    %v812 = vpop.f32.mrb[0].mxu0
    %v813 = vadd.f32 %v728, %v812
    %v814 = vpop.f32.mrb[0].mxu0
    %v815 = vpop.f32.mrb[0].mxu0
    %v816 = vpop.f32.mrb[0].mxu0
    %817 = vdwg.mxu0
    %818 = vst [vmem:[#allocation8] sm:$0xff] %v813
    // Predicated region
    $region34: #{tpu_custom_call.1} parent=1 // pred_check
      _
    $region35: #{tpu_custom_call.1} parent=1 // pred_check_branch
      %820 = sbr.rel (0) target = $region37
    $region36: #{tpu_custom_call.1} parent=1 // pred_region
      %s822 = ssub.s32 128, 128
      %823 = vsyncadd [#allocation4], %s822
      %s825 = sshll.u32 [#allocation8], 4
      %s826 = int_to_ptr.vmem [resolvable:$true] %s825
      %828 = dma.vmem_to_hbm [thread:$0]  %s826, 128, %s5, [#allocation4]
    $region37: #{tpu_custom_call.1} parent=1 // pred_fallthru
      _
    // Predicated region
    $region38: #{tpu_custom_call.1} parent=1 // pred_check
      _
    $region39: #{tpu_custom_call.1} parent=1 // pred_check_branch
      %830 = sbr.rel (0) target = $region41
    $region40: #{tpu_custom_call.1} parent=1 // pred_region
      %831 = dma.done [#allocation4], 128
    $region41: #{tpu_custom_call.1} parent=1 // pred_fallthru
      _
    %832 = vsyncpa [#allocation3], 1
    %833 = vsyncpa [#allocation6], 1
    %834 = vsyncpa [#allocation4], 1

</llo_original>
